<compile_context>
chip_gen: v7x
topology: tpu7x:2x2x1
jax: 0.10.0
libtpu: 0.0.40
codegen_flags: <defaults>
</compile_context>

<pallas_src>
import functools

import jax
import jax.numpy as jnp
import numpy as np
from jax import lax
from jax.experimental import pallas as pl
from jax.experimental.pallas import tpu as pltpu

_LN_EPS = 1e-6
_VMEM_LIMIT = 64 * 1024 * 1024  # explicit scoped-VMEM budget (fits v5e/v6e/v7x)


# --------------------------------------------------------------------------------------
# kernels
# --------------------------------------------------------------------------------------
def _layernorm_f32(x_f32, g_row, b_row):
    mu = jnp.mean(x_f32, axis=-1, keepdims=True)
    xc = x_f32 - mu
    var = jnp.mean(xc * xc, axis=-1, keepdims=True)
    return xc * lax.rsqrt(var + _LN_EPS) * g_row + b_row


def _ln_qkv_kernel(x_ref, g_ref, bt_ref, w_ref, b_ref, qkv_ref):
    # norm1 fused with a single [C, 3C] QKV projection (x tile read once, one MXU pass,
    # one lane-dense (TM, 3C) output slab).
    xn = _layernorm_f32(x_ref[...].astype(jnp.float32), g_ref[...], bt_ref[...])
    xn = xn.astype(w_ref.dtype)
    acc = jnp.dot(xn, w_ref[...], preferred_element_type=jnp.float32) + b_ref[...]
    qkv_ref[...] = acc.astype(qkv_ref.dtype)


def _attn_proj_res_kernel(qkv_ref, sc_ref, wp_ref, bp_ref, y_ref, *,
                          num_heads, head_dim, scale):
    # One batch per grid step. Heads are static column slices of the fused qkv slab
    # (no XLA transposes); the per-head outputs are concatenated into a lane-dense
    # (N, C) tile, then the output projection and the first residual are fused in.
    # TODO(synk): rope is None in this Block configuration -> identity; for production
    #             global attention (large N) add q-tiling / online softmax here.
    C = num_heads * head_dim
    qkv = qkv_ref[0]                                      # (N, 3C)
    outs = []
    for h in range(num_heads):                            # static loop over heads
        lo = h * head_dim
        q = qkv[:, lo:lo + head_dim]
        k = qkv[:, C + lo:C + lo + head_dim]
        v = qkv[:, 2 * C + lo:2 * C + lo + head_dim]
        s = lax.dot_general(q, k, (((1,), (1,)), ((), ())),
                            preferred_element_type=jnp.float32) * scale
        m = jnp.max(s, axis=-1, keepdims=True)
        p = jnp.exp(s - m)
        l = jnp.sum(p, axis=-1, keepdims=True)
        o = jnp.dot(p.astype(v.dtype), v, preferred_element_type=jnp.float32)
        outs.append(o * pl.reciprocal(l, approx=True))    # EUP reciprocal, not VPU divide
    attn = jnp.concatenate(outs, axis=-1).astype(wp_ref.dtype)   # (N, C) lane-dense
    acc = jnp.dot(attn, wp_ref[...], preferred_element_type=jnp.float32)
    y_ref[0] = (sc_ref[0].astype(jnp.float32) + acc + bp_ref[...]).astype(y_ref.dtype)


def _ffn_fused_kernel(y_ref, g2_ref, bt2_ref, w1_ref, b1_ref, w2_ref, b2_ref,
                      gf_ref, bf_ref, w3_ref, b3_ref, o_ref, *, hidden_real):
    # norm2 + SwiGLU gate + ffn_ln + W3 down-projection + second residual, all fused so
    # the [TM, Hd] gate never leaves VMEM. The hidden dim is zero-padded to a multiple of
    # 128; padded columns of x1/x2 are exactly zero (zero weight cols + zero bias), so the
    # gate's padded columns are zero and ffn_ln statistics only need a scalar correction.
    y32 = y_ref[...].astype(jnp.float32)
    xn = _layernorm_f32(y32, g2_ref[...], bt2_ref[...]).astype(w1_ref.dtype)
    x1 = jnp.dot(xn, w1_ref[...], preferred_element_type=jnp.float32) + b1_ref[...]
    x2 = jnp.dot(xn, w2_ref[...], preferred_element_type=jnp.float32) + b2_ref[...]
    h = (x1 * jax.nn.sigmoid(x1)) * x2                    # padded columns exactly 0
    pad = h.shape[-1] - hidden_real
    mu = jnp.sum(h, axis=-1, keepdims=True) / hidden_real
    d = h - mu
    var = (jnp.sum(d * d, axis=-1, keepdims=True) - pad * mu * mu) / hidden_real
    hn = (d * lax.rsqrt(var + _LN_EPS) * gf_ref[...] + bf_ref[...]).astype(w3_ref.dtype)
    acc = jnp.dot(hn, w3_ref[...], preferred_element_type=jnp.float32) + b3_ref[...]
    o_ref[...] = (y32 + acc).astype(o_ref.dtype)


# --------------------------------------------------------------------------------------
# wrapper
# --------------------------------------------------------------------------------------
def _choose_tile_m(m, target=512):
    """Largest divisor of m that is a multiple of 16 (bf16 sublane packing) and <= target,
    capped so the grid has >= 2 steps when possible (feeds both v7x TensorCores)."""
    for mult in (16, 8):
        divs = [t for t in range(mult, min(m, target) + 1, mult) if m % t == 0]
        if not divs:
            continue
        tm = divs[-1]
        if tm == m:
            halves = [t for t in divs if t <= m // 2]
            if halves:
                tm = halves[-1]
        return tm
    return m


def _row_spec(tm, n):
    return pl.BlockSpec((tm, n), lambda i: (i, 0))


def _const_spec(r, c, buffers=None):
    # Weight / bias block: same block index every step -> stays resident in VMEM.
    # buffers=1 single-buffers a resident weight (halves its VMEM footprint; useful on
    # v7x's 64 MiB VMEM at production dims).
    if buffers is None:
        return pl.BlockSpec((r, c), lambda i: (0, 0))
    return pl.BlockSpec((r, c), lambda i: (0, 0), pipeline_mode=pl.Buffered(buffers))


def _cparams(n_axes=1):
    return pltpu.CompilerParams(dimension_semantics=("parallel",) * n_axes,
                                vmem_limit_bytes=_VMEM_LIMIT)


def block_forward(x, params, num_heads, *, compute_dtype=jnp.bfloat16, weight_buffers=None):
    """EVA-ViT Block forward (eval; window_size=0, drop_path=0, no residual conv block).

    x: [B, H, W, C] -> [B, H, W, C].
    compute_dtype: MXU input dtype (bf16 default; accumulation and LayerNorm math stay f32).
    weight_buffers: optional pipeline buffer count for resident weights (set 1 on v7x).
    """
    B, H, W, C = x.shape
    N = H * W
    M = B * N
    hd = C // num_heads
    Hd = params["w1"].shape[1]
    Hdp = ((Hd + 127) // 128) * 128                 # lane-dense SwiGLU hidden width
    out_dtype = x.dtype
    cdt = jnp.dtype(compute_dtype) if compute_dtype is not None else jnp.dtype(x.dtype)
    isz = cdt.itemsize
    xsz = jnp.dtype(x.dtype).itemsize
    f32 = jnp.float32

    def _pad_cols(a, width):
        return jnp.pad(a, ((0, 0), (0, width - a.shape[1])))

    def _pad_vec(v, width):
        return jnp.pad(v, (0, width - v.shape[0]))

    # LayerNorm / bias parameters stay f32 (applied on the f32 accumulators).
    g1 = params["ln1_g"].reshape(1, C).astype(f32)
    b1t = params["ln1_b"].reshape(1, C).astype(f32)
    g2 = params["ln2_g"].reshape(1, C).astype(f32)
    b2t = params["ln2_b"].reshape(1, C).astype(f32)
    gf = _pad_vec(params["ffn_ln_g"].astype(f32), Hdp).reshape(1, Hdp)
    bf = _pad_vec(params["ffn_ln_b"].astype(f32), Hdp).reshape(1, Hdp)
    bqkv = jnp.concatenate(
        [params["bq"].astype(f32), jnp.zeros((C,), f32), params["bv"].astype(f32)]
    ).reshape(1, 3 * C)
    bp = params["bp"].reshape(1, C).astype(f32)
    b1m = _pad_vec(params["b1"].astype(f32), Hdp).reshape(1, Hdp)
    b2m = _pad_vec(params["b2"].astype(f32), Hdp).reshape(1, Hdp)
    b3m = params["b3"].reshape(1, C).astype(f32)

    # Matmul weights in the compute dtype (fused QKV, padded SwiGLU weights).
    wqkv = jnp.concatenate([params["wq"], params["wk"], params["wv"]], axis=1).astype(cdt)
    wp = params["wp"].astype(cdt)
    w1 = _pad_cols(params["w1"], Hdp).astype(cdt)
    w2 = _pad_cols(params["w2"], Hdp).astype(cdt)
    w3 = jnp.pad(params["w3"], ((0, Hdp - Hd), (0, 0))).astype(cdt)

    x_flat = x.reshape(M, C)                        # stays f32; cast happens in-kernel
    TM = _choose_tile_m(M)
    grid_m = (pl.cdiv(M, TM),)

    # ---- 1) norm1 + fused QKV projection ----------------------------------------------
    qkv = pl.pallas_call(
        _ln_qkv_kernel,
        out_shape=jax.ShapeDtypeStruct((M, 3 * C), cdt),
        grid_spec=pltpu.PrefetchScalarGridSpec(
            num_scalar_prefetch=0,
            grid=grid_m,
            in_specs=[
                _row_spec(TM, C),                                   # x tile
                _const_spec(1, C), _const_spec(1, C),               # ln1 gamma/beta
                _const_spec(C, 3 * C, weight_buffers),              # Wq|Wk|Wv
                _const_spec(1, 3 * C),                              # bq|0|bv
            ],
            out_specs=_row_spec(TM, 3 * C),
        ),
        compiler_params=_cparams(),
        cost_estimate=pl.CostEstimate(
            flops=int(6 * M * C * C), transcendentals=int(M),
            bytes_accessed=int(M * C * xsz + (3 * M * C + 3 * C * C) * isz)),
    )(x_flat, g1, b1t, wqkv, bqkv)

    # ---- 2) multi-head attention + out projection + first residual ---------------------
    qkv3 = qkv.reshape(B, N, 3 * C)                 # free reshape (contiguous)
    sc3 = x.reshape(B, N, C)
    scale = float(hd) ** -0.5

    y1 = pl.pallas_call(
        functools.partial(_attn_proj_res_kernel,
                          num_heads=num_heads, head_dim=hd, scale=scale),
        out_shape=jax.ShapeDtypeStruct((B, N, C), cdt),
        grid_spec=pltpu.PrefetchScalarGridSpec(
            num_scalar_prefetch=0,
            grid=(B,),
            in_specs=[
                pl.BlockSpec((1, N, 3 * C), lambda b: (b, 0, 0)),   # fused qkv slab
                pl.BlockSpec((1, N, C), lambda b: (b, 0, 0)),       # shortcut (residual)
                _const_spec(C, C, weight_buffers),                  # Wp
                _const_spec(1, C),                                  # bp
            ],
            out_specs=pl.BlockSpec((1, N, C), lambda b: (b, 0, 0)),
        ),
        compiler_params=_cparams(),
        cost_estimate=pl.CostEstimate(
            flops=int(4 * B * num_heads * N * N * hd + 2 * M * C * C),
            transcendentals=int(B * num_heads * N * N),
            bytes_accessed=int((4 * M * C + C * C) * isz + M * C * xsz)),
    )(qkv3, sc3, wp, bp)

    # ---- 3) norm2 + SwiGLU + ffn_ln + W3 + second residual (fully fused) ---------------
    y_flat = y1.reshape(M, C)                       # free reshape; already compute dtype
    out = pl.pallas_call(
        functools.partial(_ffn_fused_kernel, hidden_real=Hd),
        out_shape=jax.ShapeDtypeStruct((M, C), out_dtype),
        grid_spec=pltpu.PrefetchScalarGridSpec(
            num_scalar_prefetch=0,
            grid=grid_m,
            in_specs=[
                _row_spec(TM, C),                                   # y1 tile
                _const_spec(1, C), _const_spec(1, C),               # ln2 gamma/beta
                _const_spec(C, Hdp, weight_buffers), _const_spec(1, Hdp),   # W1, b1
                _const_spec(C, Hdp, weight_buffers), _const_spec(1, Hdp),   # W2, b2
                _const_spec(1, Hdp), _const_spec(1, Hdp),           # ffn_ln gamma/beta
                _const_spec(Hdp, C, weight_buffers), _const_spec(1, C),     # W3, b3
            ],
            out_specs=_row_spec(TM, C),
        ),
        compiler_params=_cparams(),
        cost_estimate=pl.CostEstimate(
            flops=int(6 * M * C * Hdp),
            transcendentals=int(M * Hdp + 2 * M),
            bytes_accessed=int((M * C + 3 * C * Hdp) * isz + M * C * xsz)),
    )(y_flat, g2, b2t, w1, b1m, w2, b2m, gf, bf, w3, b3m)

    return out.reshape(B, H, W, C)


# --------------------------------------------------------------------------------------
# pure-JAX reference (same math as the PyTorch Block in eval mode)
# --------------------------------------------------------------------------------------
def _reference_block(x, params, num_heads, eps=_LN_EPS):
    B, H, W, C = x.shape
    N = H * W
    hd = C // num_heads

    def ln(t, g, b):
        mu = t.mean(-1, keepdims=True)
        var = jnp.mean((t - mu) ** 2, -1, keepdims=True)
        return (t - mu) / jnp.sqrt(var + eps) * g + b

    shortcut = x.reshape(B, N, C)
    xn = ln(shortcut, params["ln1_g"], params["ln1_b"])
    q = xn @ params["wq"] + params["bq"]
    k = xn @ params["wk"]
    v = xn @ params["wv"] + params["bv"]

    def heads(t):
        return t.reshape(B, N, num_heads, hd).transpose(0, 2, 1, 3)

    q, k, v = heads(q), heads(k), heads(v)
    s = jnp.einsum("bhqd,bhkd->bhqk", q, k) * (hd ** -0.5)
    p = jax.nn.softmax(s, axis=-1)
    o = jnp.einsum("bhqk,bhkd->bhqd", p, v)
    o = o.transpose(0, 2, 1, 3).reshape(B, N, C)
    y1 = shortcut + (o @ params["wp"] + params["bp"])

    xn2 = ln(y1, params["ln2_g"], params["ln2_b"])
    a = xn2 @ params["w1"] + params["b1"]
    g = xn2 @ params["w2"] + params["b2"]
    hgate = (a * jax.nn.sigmoid(a)) * g
    hn = ln(hgate, params["ffn_ln_g"], params["ffn_ln_b"])
    out = y1 + (hn @ params["w3"] + params["b3"])
    return out.reshape(B, H, W, C)


if __name__ == "__main__":
    # Small shapes consistent with the module: B=2, 8x8 tokens, dim=64, 4 heads,
    # SwiGLU hidden = int(dim * 4*2/3) = 170 (deliberately a non-128 multiple).
    B, H, W = 2, 8, 8
    dim, num_heads = 64, 4
    hidden = int(dim * (4 * 2 / 3))

    key = jax.random.PRNGKey(0)
    keys = jax.random.split(key, 20)

    def nrm(k, shape, scale=0.05):
        return jax.random.normal(k, shape, dtype=jnp.float32) * scale

    params = dict(
        ln1_g=1.0 + nrm(keys[0], (dim,), 0.1), ln1_b=nrm(keys[1], (dim,), 0.1),
        wq=nrm(keys[2], (dim, dim)), wk=nrm(keys[3], (dim, dim)), wv=nrm(keys[4], (dim, dim)),
        bq=nrm(keys[5], (dim,), 0.02), bv=nrm(keys[6], (dim,), 0.02),
        wp=nrm(keys[7], (dim, dim)), bp=nrm(keys[8], (dim,), 0.02),
        ln2_g=1.0 + nrm(keys[9], (dim,), 0.1), ln2_b=nrm(keys[10], (dim,), 0.1),
        w1=nrm(keys[11], (dim, hidden)), b1=nrm(keys[12], (hidden,), 0.02),
        w2=nrm(keys[13], (dim, hidden)), b2=nrm(keys[14], (hidden,), 0.02),
        ffn_ln_g=1.0 + nrm(keys[15], (hidden,), 0.1), ffn_ln_b=nrm(keys[16], (hidden,), 0.1),
        w3=nrm(keys[17], (hidden, dim)), b3=nrm(keys[18], (dim,), 0.02),
    )
    x = jax.random.normal(keys[19], (B, H, W, dim), dtype=jnp.float32)

    ref = _reference_block(x, params, num_heads)

    # f32 compute path: tight check against the pure-JAX reference.
    out_f32 = jax.block_until_ready(
        block_forward(x, params, num_heads, compute_dtype=jnp.float32))
    assert out_f32.shape == (B, H, W, dim)
    np.testing.assert_allclose(np.asarray(out_f32), np.asarray(ref), rtol=5e-3, atol=5e-3)

    # Default bf16 compute path (f32 accumulation): looser tolerance.
    out_bf16 = jax.block_until_ready(block_forward(x, params, num_heads))
    assert out_bf16.shape == (B, H, W, dim)
    np.testing.assert_allclose(np.asarray(out_bf16), np.asarray(ref), rtol=5e-2, atol=5e-2)

    print("KERNEL_OK")
</pallas_src>

<mosaic_0001>
module attributes {stable_mosaic.version = 11 : i64} {
  func.func @_ln_qkv_kernel(%arg0: i32, %arg1: memref<64x64xf32, #tpu.memory_space<vmem>>, %arg2: memref<1x64xf32, #tpu.memory_space<vmem>>, %arg3: memref<1x64xf32, #tpu.memory_space<vmem>>, %arg4: memref<64x192xf32, #tpu.memory_space<vmem>>, %arg5: memref<1x192xf32, #tpu.memory_space<vmem>>, %arg6: memref<64x192xf32, #tpu.memory_space<vmem>>) attributes {dimension_semantics = [#tpu.dimension_semantics<parallel>], iteration_bounds = array<i64: 2>, scalar_prefetch = 0 : i64, scratch_operands = 0 : i64, tpu.core_type = #tpu.core_type<tc>, window_params = [{transform_indices = @transform_0, window_bounds = array<i64: 64, 64>}, {pipeline_mode = #tpu.pipeline_mode<synchronous>, transform_indices = @transform_1, window_bounds = array<i64: 1, 64>}, {pipeline_mode = #tpu.pipeline_mode<synchronous>, transform_indices = @transform_2, window_bounds = array<i64: 1, 64>}, {pipeline_mode = #tpu.pipeline_mode<synchronous>, transform_indices = @transform_3, window_bounds = array<i64: 64, 192>}, {pipeline_mode = #tpu.pipeline_mode<synchronous>, transform_indices = @transform_4, window_bounds = array<i64: 1, 192>}, {transform_indices = @transform_5, window_bounds = array<i64: 64, 192>}]} {
    %c0 = arith.constant 0 : index
    %c0_0 = arith.constant 0 : index
    %0 = vector.load %arg1[%c0, %c0_0] : memref<64x64xf32, #tpu.memory_space<vmem>>, vector<64x64xf32>
    %c0_1 = arith.constant 0 : index
    %c0_2 = arith.constant 0 : index
    %1 = vector.load %arg2[%c0_1, %c0_2] : memref<1x64xf32, #tpu.memory_space<vmem>>, vector<1x64xf32>
    %c0_3 = arith.constant 0 : index
    %c0_4 = arith.constant 0 : index
    %2 = vector.load %arg3[%c0_3, %c0_4] : memref<1x64xf32, #tpu.memory_space<vmem>>, vector<1x64xf32>
    %cst = arith.constant dense<0.000000e+00> : vector<64xf32>
    %3 = vector.multi_reduction <add>, %0, %cst [1] : vector<64x64xf32> to vector<64xf32>
    %4 = vector.shape_cast %3 : vector<64xf32> to vector<64x1xf32>
    %cst_5 = arith.constant 6.400000e+01 : f32
    %5 = vector.broadcast %cst_5 : f32 to vector<64x1xf32>
    %6 = arith.divf %4, %5 : vector<64x1xf32>
    %7 = vector.broadcast %6 : vector<64x1xf32> to vector<64x64xf32>
    %8 = arith.subf %0, %7 : vector<64x64xf32>
    %9 = arith.mulf %8, %8 : vector<64x64xf32>
    %cst_6 = arith.constant dense<0.000000e+00> : vector<64xf32>
    %10 = vector.multi_reduction <add>, %9, %cst_6 [1] : vector<64x64xf32> to vector<64xf32>
    %11 = vector.shape_cast %10 : vector<64xf32> to vector<64x1xf32>
    %cst_7 = arith.constant 6.400000e+01 : f32
    %12 = vector.broadcast %cst_7 : f32 to vector<64x1xf32>
    %13 = arith.divf %11, %12 : vector<64x1xf32>
    %cst_8 = arith.constant 9.99999997E-7 : f32
    %14 = vector.broadcast %cst_8 : f32 to vector<64x1xf32>
    %15 = arith.addf %13, %14 : vector<64x1xf32>
    %16 = math.rsqrt %15 : vector<64x1xf32>
    %17 = vector.broadcast %16 : vector<64x1xf32> to vector<64x64xf32>
    %18 = arith.mulf %8, %17 : vector<64x64xf32>
    %19 = vector.broadcast %1 : vector<1x64xf32> to vector<64x64xf32>
    %20 = arith.mulf %18, %19 : vector<64x64xf32>
    %21 = vector.broadcast %2 : vector<1x64xf32> to vector<64x64xf32>
    %22 = arith.addf %20, %21 : vector<64x64xf32>
    %c0_9 = arith.constant 0 : index
    %c0_10 = arith.constant 0 : index
    %23 = vector.load %arg4[%c0_9, %c0_10] : memref<64x192xf32, #tpu.memory_space<vmem>>, vector<64x192xf32>
    %cst_11 = arith.constant dense<0.000000e+00> : vector<64x192xf32>
    %24 = tpu.matmul %22, %23, %cst_11 {dimension_numbers = #tpu.dot_dimension_numbers<[1], [0], [0], [1], [0, 0, 1, 1], [], []>} : vector<64x64xf32>, vector<64x192xf32>, vector<64x192xf32> -> vector<64x192xf32>
    %c0_12 = arith.constant 0 : index
    %c0_13 = arith.constant 0 : index
    %25 = vector.load %arg5[%c0_12, %c0_13] : memref<1x192xf32, #tpu.memory_space<vmem>>, vector<1x192xf32>
    %26 = vector.broadcast %25 : vector<1x192xf32> to vector<64x192xf32>
    %27 = arith.addf %24, %26 : vector<64x192xf32>
    %c0_14 = arith.constant 0 : index
    %c0_15 = arith.constant 0 : index
    %28 = vector.load %arg6[%c0_14, %c0_15] : memref<64x192xf32, #tpu.memory_space<vmem>>, vector<64x192xf32>
    tpu.vector_store %arg6[%c0_14, %c0_15], %27 {strides = array<i32>} : memref<64x192xf32, #tpu.memory_space<vmem>>, vector<64x192xf32>,
    return
  }
  func.func @transform_0(%arg0: i32) -> (i32, i32) {
    %c0_i32 = arith.constant 0 : i32
    %c0_i32_0 = arith.constant 0 : i32
    return %arg0, %c0_i32 : i32, i32
  }
  func.func @transform_1(%arg0: i32) -> (i32, i32) {
    %c0_i32 = arith.constant 0 : i32
    %c0_i32_0 = arith.constant 0 : i32
    %c0_i32_1 = arith.constant 0 : i32
    return %c0_i32, %c0_i32_0 : i32, i32
  }
  func.func @transform_2(%arg0: i32) -> (i32, i32) {
    %c0_i32 = arith.constant 0 : i32
    %c0_i32_0 = arith.constant 0 : i32
    %c0_i32_1 = arith.constant 0 : i32
    return %c0_i32, %c0_i32_0 : i32, i32
  }
  func.func @transform_3(%arg0: i32) -> (i32, i32) {
    %c0_i32 = arith.constant 0 : i32
    %c0_i32_0 = arith.constant 0 : i32
    %c0_i32_1 = arith.constant 0 : i32
    return %c0_i32, %c0_i32_0 : i32, i32
  }
  func.func @transform_4(%arg0: i32) -> (i32, i32) {
    %c0_i32 = arith.constant 0 : i32
    %c0_i32_0 = arith.constant 0 : i32
    %c0_i32_1 = arith.constant 0 : i32
    return %c0_i32, %c0_i32_0 : i32, i32
  }
  func.func @transform_5(%arg0: i32) -> (i32, i32) {
    %c0_i32 = arith.constant 0 : i32
    %c0_i32_0 = arith.constant 0 : i32
    return %arg0, %c0_i32 : i32, i32
  }
}

</mosaic_0001>

<llo_original>
// kernel: tpu_custom_call.1
$region0: #{tpu_custom_call.1}
  #allocation0 [shape = 'u32[]', space=smem, size = 0x4, offset = 0x4, fixed_abs, tag = 'smem constant byte address 0x4 - core index']
  #allocation1 [shape = 'u32[144,128]{1,0:T(1,128)}', space=vmem, size = 0x12000, scoped, tag = 'internal scratch']
  %s0 = inlined_call_operand.hbm [shape: f32[128,64], index: 0, kind: input, shape index: {}]
  %s1 = inlined_call_operand.hbm [shape: f32[1,64], index: 1, kind: input, shape index: {}]
  %s2 = inlined_call_operand.hbm [shape: f32[1,64], index: 2, kind: input, shape index: {}]
  %s3 = inlined_call_operand.hbm [shape: f32[64,192], index: 3, kind: input, shape index: {}]
  %s4 = inlined_call_operand.hbm [shape: f32[1,192], index: 4, kind: input, shape index: {}]
  %s5 = inlined_call_operand.hbm [shape: f32[128,192], index: 5, kind: output, shape index: {}]
  %s6 = sld [smem:[#allocation0]]
  $region73: #{tpu_custom_call.1} parent=0
    _
  %s8 = ssub.s32 1, %s6
  %s9 = scalar_select 0, %s8, %s6
  $region1: #{tpu_custom_call.1} parent=0
    #allocation2 [shape = 'u8[65536]{0}', space=vmem, size = 0x10000, scoped, tag = 'input window, operand 0']
    #allocation3 [shape = 's32[2]{0}', space=sflag, size = 0x8, scoped, tag = 'scoped memory for tpu_custom_call.1']
    #allocation4 [shape = 's32[2]{0}', space=sflag, size = 0x8, scoped, tag = 'scoped memory for tpu_custom_call.1']
    #allocation5 [shape = 'u8[512]{0}', space=vmem, size = 0x400, scoped, tag = 'input window, operand 1, single buffered']
    #allocation6 [shape = 's32[1]{0}', space=sflag, size = 0x4, scoped, tag = 'scoped memory for tpu_custom_call.1']
    #allocation7 [shape = 'u8[512]{0}', space=vmem, size = 0x400, scoped, tag = 'input window, operand 2, single buffered']
    #allocation8 [shape = 'u8[65536]{0}', space=vmem, size = 0x10000, scoped, tag = 'input window, operand 3, single buffered']
    #allocation9 [shape = 's32[1]{0}', space=sflag, size = 0x4, scoped, tag = 'scoped memory for tpu_custom_call.1']
    #allocation10 [shape = 'u8[1024]{0}', space=vmem, size = 0x400, scoped, tag = 'input window, operand 4, single buffered']
    #allocation11 [shape = 'u8[131072]{0}', space=vmem, size = 0x20000, scoped, tag = 'output window, operand 0']
    %10 = vsyncpa [#allocation3], 0
    %s11 = scalar_lea.sflag [#allocation3], 1
    %12 = vsyncpa %s11, 0
    %13 = vsyncpa [#allocation6], 0
    %14 = vsyncpa [#allocation9], 0
    %15 = vsyncpa [#allocation4], 0
    %s16 = scalar_lea.sflag [#allocation4], 1
    %17 = vsyncpa %s16, 0
    loop: start=0, step=1, limit=4
    $region2: #{tpu_custom_call.1} parent=1 // loop_pre_header
      _
    $region3: #{tpu_custom_call.1} parent=1 // loop_header
      %s19 = sphi 0, %s23
      %p20 = scmp.ge.s32.totalorder %s19, 4
      %s29 = sphi 0, %s31
      %s32 = sphi 0, %s29
      %s33 = sphi 0, %s32
      %s49 = sphi 0, %s33
      %s53 = sphi 0, %s53
      %s55 = sphi 0, %s53
      %s56 = sphi 0, %s55
      %s70 = sphi 0, %s56
      %s74 = sphi 0, %s74
      %s76 = sphi 0, %s74
      %s77 = sphi 0, %s76
      %s91 = sphi 0, %s77
      %s95 = sphi 0, %s95
      %s97 = sphi 0, %s95
      %s98 = sphi 0, %s97
      %s112 = sphi 0, %s98
      %s116 = sphi 0, %s116
      %s118 = sphi 0, %s116
      %s119 = sphi 0, %s118
      %s133 = sphi 0, %s119
      %s139 = sphi 0, %s141
      %s142 = sphi 0, %s139
      %s143 = sphi 0, %s142
      %s159 = sphi 0, %s143
    $region4: #{tpu_custom_call.1} parent=1 // loop_header_branch
      %22 = sbr.rel (%p20) target = $region8
    $region5: #{tpu_custom_call.1} parent=1 // loop_body
      %s24 = ssub.s32 %s19, 1
      %s25 = ssub.s32 %s19, 2
      %s26 = sadd.s32 %s19, 1
      %s27 = ssub.s32 %s19, %s26
      %p28 = scmp.eq.s32.totalorder %s27, 0
      %s30 = sadd.s32 %s29, 1
      %s31 = scalar_select %p28, %s29, %s30
      %p34 = pneg %p28
      %p35 = scmp.eq.s32.totalorder %s19, 1
      %p36 = por %p34, %p35
      %p37 = scmp.ne.s32.totalorder %s29, %s32
      %p38 = scmp.eq.s32.totalorder %s19, 0
      %p39 = por %p37, %p38
      %p40 = scmp.ne.s32.totalorder %s29, %s32
      %p41 = scmp.eq.s32.totalorder %s24, 1
      %p42 = por %p40, %p41
      %p43 = scmp.ne.s32.totalorder %s32, %s33
      %p44 = scmp.eq.s32.totalorder %s24, 0
      %p45 = por %p43, %p44
      %p46 = scmp.ne.s32.totalorder %s32, %s33
      %p47 = scmp.eq.s32.totalorder %s25, 1
      %p48 = por %p46, %p47
      %p50 = scmp.ne.s32.totalorder %s33, %s49
      %p51 = scmp.eq.s32.totalorder %s25, 0
      %p52 = por %p50, %p51
      %s54 = sadd.s32 %s53, 1
      %p57 = scmp.eq.s32.totalorder %s19, 1
      %p58 = scmp.ne.s32.totalorder %s53, %s55
      %p59 = scmp.eq.s32.totalorder %s19, 0
      %p60 = por %p58, %p59
      %p61 = scmp.ne.s32.totalorder %s53, %s55
      %p62 = scmp.eq.s32.totalorder %s24, 1
      %p63 = por %p61, %p62
      %p64 = scmp.ne.s32.totalorder %s55, %s56
      %p65 = scmp.eq.s32.totalorder %s24, 0
      %p66 = por %p64, %p65
      %p67 = scmp.ne.s32.totalorder %s55, %s56
      %p68 = scmp.eq.s32.totalorder %s25, 1
      %p69 = por %p67, %p68
      %p71 = scmp.ne.s32.totalorder %s56, %s70
      %p72 = scmp.eq.s32.totalorder %s25, 0
      %p73 = por %p71, %p72
      %s75 = sadd.s32 %s74, 1
      %p78 = scmp.eq.s32.totalorder %s19, 1
      %p79 = scmp.ne.s32.totalorder %s74, %s76
      %p80 = scmp.eq.s32.totalorder %s19, 0
      %p81 = por %p79, %p80
      %p82 = scmp.ne.s32.totalorder %s74, %s76
      %p83 = scmp.eq.s32.totalorder %s24, 1
      %p84 = por %p82, %p83
      %p85 = scmp.ne.s32.totalorder %s76, %s77
      %p86 = scmp.eq.s32.totalorder %s24, 0
      %p87 = por %p85, %p86
      %p88 = scmp.ne.s32.totalorder %s76, %s77
      %p89 = scmp.eq.s32.totalorder %s25, 1
      %p90 = por %p88, %p89
      %p92 = scmp.ne.s32.totalorder %s77, %s91
      %p93 = scmp.eq.s32.totalorder %s25, 0
      %p94 = por %p92, %p93
      %s96 = sadd.s32 %s95, 1
      %p99 = scmp.eq.s32.totalorder %s19, 1
      %p100 = scmp.ne.s32.totalorder %s95, %s97
      %p101 = scmp.eq.s32.totalorder %s19, 0
      %p102 = por %p100, %p101
      %p103 = scmp.ne.s32.totalorder %s95, %s97
      %p104 = scmp.eq.s32.totalorder %s24, 1
      %p105 = por %p103, %p104
      %p106 = scmp.ne.s32.totalorder %s97, %s98
      %p107 = scmp.eq.s32.totalorder %s24, 0
      %p108 = por %p106, %p107
      %p109 = scmp.ne.s32.totalorder %s97, %s98
      %p110 = scmp.eq.s32.totalorder %s25, 1
      %p111 = por %p109, %p110
      %p113 = scmp.ne.s32.totalorder %s98, %s112
      %p114 = scmp.eq.s32.totalorder %s25, 0
      %p115 = por %p113, %p114
      %s117 = sadd.s32 %s116, 1
      %p120 = scmp.eq.s32.totalorder %s19, 1
      %p121 = scmp.ne.s32.totalorder %s116, %s118
      %p122 = scmp.eq.s32.totalorder %s19, 0
      %p123 = por %p121, %p122
      %p124 = scmp.ne.s32.totalorder %s116, %s118
      %p125 = scmp.eq.s32.totalorder %s24, 1
      %p126 = por %p124, %p125
      %p127 = scmp.ne.s32.totalorder %s118, %s119
      %p128 = scmp.eq.s32.totalorder %s24, 0
      %p129 = por %p127, %p128
      %p130 = scmp.ne.s32.totalorder %s118, %s119
      %p131 = scmp.eq.s32.totalorder %s25, 1
      %p132 = por %p130, %p131
      %p134 = scmp.ne.s32.totalorder %s119, %s133
      %p135 = scmp.eq.s32.totalorder %s25, 0
      %p136 = por %p134, %p135
      %s137 = ssub.s32 %s19, %s26
      %p138 = scmp.eq.s32.totalorder %s137, 0
      %s140 = sadd.s32 %s139, 1
      %s141 = scalar_select %p138, %s139, %s140
      %p144 = pneg %p138
      %p145 = scmp.eq.s32.totalorder %s19, 1
      %p146 = por %p144, %p145
      %p147 = scmp.ne.s32.totalorder %s139, %s142
      %p148 = scmp.eq.s32.totalorder %s19, 0
      %p149 = por %p147, %p148
      %p150 = scmp.ne.s32.totalorder %s139, %s142
      %p151 = scmp.eq.s32.totalorder %s24, 1
      %p152 = por %p150, %p151
      %p153 = scmp.ne.s32.totalorder %s142, %s143
      %p154 = scmp.eq.s32.totalorder %s24, 0
      %p155 = por %p153, %p154
      %p156 = scmp.ne.s32.totalorder %s142, %s143
      %p157 = scmp.eq.s32.totalorder %s25, 1
      %p158 = por %p156, %p157
      %p160 = scmp.ne.s32.totalorder %s143, %s159
      %p161 = scmp.eq.s32.totalorder %s25, 0
      %p162 = por %p160, %p161
      %p163 = scmp.le.s32.totalorder 1, %s19
      %p164 = scmp.lt.s32.totalorder %s19, 3
      %p165 = pnand %p163, %p164
      %p166 = pneg %p165
      // Predicated region
      $region9: #{tpu_custom_call.1} parent=5 // pred_check
        _
      $region10: #{tpu_custom_call.1} parent=5 // pred_check_branch
        %168 = sbr.rel (%p165) target = $region12
      $region11: #{tpu_custom_call.1} parent=5 // pred_region
        %s169 = ssub.s32 %s19, 1
        // Predicated region
        $region13: #{tpu_custom_call.1} parent=11 // pred_check
          %p170 = pneg %p66
        $region14: #{tpu_custom_call.1} parent=11 // pred_check_branch
          %172 = sbr.rel (%p170) target = $region16
        $region15: #{tpu_custom_call.1} parent=11 // pred_region
          %s174 = ssub.s32 16, 16
          %175 = vsyncadd [#allocation6], %s174
          %s177 = sshll.u32 [#allocation5], 4
          %s178 = int_to_ptr.vmem [resolvable:$true] %s177
          %180 = dma.hbm_to_vmem [thread:$0]  %s1, 16, %s178, [#allocation6]
        $region16: #{tpu_custom_call.1} parent=11 // pred_fallthru
          _
        // Predicated region
        $region17: #{tpu_custom_call.1} parent=11 // pred_check
          %p181 = pneg %p87
        $region18: #{tpu_custom_call.1} parent=11 // pred_check_branch
          %183 = sbr.rel (%p181) target = $region20
        $region19: #{tpu_custom_call.1} parent=11 // pred_region
          %s185 = ssub.s32 16, 16
          %186 = vsyncadd [#allocation6], %s185
          %s188 = sshll.u32 [#allocation7], 4
          %s189 = int_to_ptr.vmem [resolvable:$true] %s188
          %191 = dma.hbm_to_vmem [thread:$0]  %s2, 16, %s189, [#allocation6]
        $region20: #{tpu_custom_call.1} parent=11 // pred_fallthru
          _
        // Predicated region
        $region21: #{tpu_custom_call.1} parent=11 // pred_check
          %p192 = pneg %p108
        $region22: #{tpu_custom_call.1} parent=11 // pred_check_branch
          %194 = sbr.rel (%p192) target = $region24
        $region23: #{tpu_custom_call.1} parent=11 // pred_region
          %s196 = ssub.s32 2048, 2048
          %197 = vsyncadd [#allocation9], %s196
          %s198 = sshll.u32 [#allocation8], 4
          %s199 = int_to_ptr.vmem [resolvable:$true] %s198
          %204 = dma.hbm_to_vmem [thread:$0]  %s3, 2048, %s199, [#allocation9], 256, 256, 16
        $region24: #{tpu_custom_call.1} parent=11 // pred_fallthru
          _
        // Predicated region
        $region25: #{tpu_custom_call.1} parent=11 // pred_check
          %p205 = pneg %p129
        $region26: #{tpu_custom_call.1} parent=11 // pred_check_branch
          %207 = sbr.rel (%p205) target = $region28
        $region27: #{tpu_custom_call.1} parent=11 // pred_region
          %s209 = ssub.s32 32, 32
          %210 = vsyncadd [#allocation9], %s209
          %s212 = sshll.u32 [#allocation10], 4
          %s213 = int_to_ptr.vmem [resolvable:$true] %s212
          %215 = dma.hbm_to_vmem [thread:$0]  %s4, 32, %s213, [#allocation9]
        $region28: #{tpu_custom_call.1} parent=11 // pred_fallthru
          _
      $region12: #{tpu_custom_call.1} parent=5 // pred_fallthru
        _
      %p216 = scmp.lt.s32.totalorder %s19, 2
      // Predicated region
      $region29: #{tpu_custom_call.1} parent=5 // pred_check
        %p217 = pneg %p216
      $region30: #{tpu_custom_call.1} parent=5 // pred_check_branch
        %219 = sbr.rel (%p217) target = $region32
      $region31: #{tpu_custom_call.1} parent=5 // pred_region
        // Predicated region
        $region33: #{tpu_custom_call.1} parent=31 // pred_check
          %p220 = pneg %p39
        $region34: #{tpu_custom_call.1} parent=31 // pred_check_branch
          %222 = sbr.rel (%p220) target = $region36
        $region35: #{tpu_custom_call.1} parent=31 // pred_region
          %s223 = sand.u32 %s29, 1
          %s224 = scalar_lea.sflag [#allocation3], %s223
          %s225 = sand.u32 %s29, 1
          %s226 = smul.addr %s225, 64
          %s227 = scalar_lea.vmem [#allocation2], %s226
          %s228 = smul.u32 8, %s19
          %s230 = ssub.s32 1024, 1024
          %231 = vsyncadd %s224, %s230
          %s232 = smul.addr %s228, 128
          %s233 = scalar_lea.hbm %s0, %s232
          %s234 = sshll.u32 %s227, 4
          %s235 = int_to_ptr.vmem [resolvable:$true] %s234
          %240 = dma.hbm_to_vmem [thread:$0]  %s233, 1024, %s235, %s224, 128, 128, 8
        $region36: #{tpu_custom_call.1} parent=31 // pred_fallthru
          _
      $region32: #{tpu_custom_call.1} parent=5 // pred_fallthru
        _
      %p241 = scmp.le.s32.totalorder 1, %s19
      %p242 = scmp.lt.s32.totalorder %s19, 3
      %p243 = pnand %p241, %p242
      %p244 = pneg %p243
      // Predicated region
      $region37: #{tpu_custom_call.1} parent=5 // pred_check
        _
      $region38: #{tpu_custom_call.1} parent=5 // pred_check_branch
        %246 = sbr.rel (%p243) target = $region40
      $region39: #{tpu_custom_call.1} parent=5 // pred_region
        %s247 = ssub.s32 %s19, 1
        %s248 = sand.u32 %s32, 1
        %s249 = scalar_lea.sflag [#allocation3], %s248
        %s250 = sand.u32 %s32, 1
        %s251 = smul.addr %s250, 64
        %s252 = scalar_lea.vmem [#allocation2], %s251
        // Predicated region
        $region41: #{tpu_custom_call.1} parent=39 // pred_check
          %p253 = pneg %p45
        $region42: #{tpu_custom_call.1} parent=39 // pred_check_branch
          %255 = sbr.rel (%p253) target = $region44
        $region43: #{tpu_custom_call.1} parent=39 // pred_region
          %256 = dma.done %s249, 1024
        $region44: #{tpu_custom_call.1} parent=39 // pred_fallthru
          _
        // Predicated region
        $region45: #{tpu_custom_call.1} parent=39 // pred_check
          %p257 = pneg %p66
        $region46: #{tpu_custom_call.1} parent=39 // pred_check_branch
          %259 = sbr.rel (%p257) target = $region48
        $region47: #{tpu_custom_call.1} parent=39 // pred_region
          %260 = dma.done [#allocation6], 16
        $region48: #{tpu_custom_call.1} parent=39 // pred_fallthru
          _
        // Predicated region
        $region49: #{tpu_custom_call.1} parent=39 // pred_check
          %p261 = pneg %p87
        $region50: #{tpu_custom_call.1} parent=39 // pred_check_branch
          %263 = sbr.rel (%p261) target = $region52
        $region51: #{tpu_custom_call.1} parent=39 // pred_region
          %264 = dma.done [#allocation6], 16
        $region52: #{tpu_custom_call.1} parent=39 // pred_fallthru
          _
        // Predicated region
        $region53: #{tpu_custom_call.1} parent=39 // pred_check
          %p265 = pneg %p108
        $region54: #{tpu_custom_call.1} parent=39 // pred_check_branch
          %267 = sbr.rel (%p265) target = $region56
        $region55: #{tpu_custom_call.1} parent=39 // pred_region
          %268 = dma.done [#allocation9], 2048
        $region56: #{tpu_custom_call.1} parent=39 // pred_fallthru
          _
        // Predicated region
        $region57: #{tpu_custom_call.1} parent=39 // pred_check
          %p269 = pneg %p129
        $region58: #{tpu_custom_call.1} parent=39 // pred_check_branch
          %271 = sbr.rel (%p269) target = $region60
        $region59: #{tpu_custom_call.1} parent=39 // pred_region
          %272 = dma.done [#allocation9], 32
        $region60: #{tpu_custom_call.1} parent=39 // pred_fallthru
          _
        %s273 = sand.u32 %s32, 1
        %s274 = scalar_lea.sflag [#allocation3], %s273
        %s275 = sand.u32 %s32, 1
        %s276 = smul.addr %s275, 64
        %s277 = scalar_lea.vmem [#allocation2], %s276
        %p278 = pneg %p45
        %p279 = pneg %p42
        %p280 = pneg %p66
        %p281 = pneg %p63
        %p282 = pneg %p87
        %p283 = pneg %p84
        %p284 = pneg %p108
        %p285 = pneg %p105
        %p286 = pneg %p129
        %p287 = pneg %p126
        %p288 = pneg %p155
        %p289 = pneg %p152
        %s290 = sand.u32 %s142, 1
        %s291 = scalar_lea.sflag [#allocation4], %s290
        %s292 = sand.u32 %s142, 1
        %s293 = smul.addr %s292, 128
        %s294 = scalar_lea.vmem [#allocation11], %s293
        %s295 = smul.u32 8, %s24
        %s296 = smul.u32 8, %s24
        %v297 = vld [vmem:[%s252] sm:$0xff]
        %v298 = vld [vmem:[%s252 + $0x8] sm:$0xff]
        %v299 = vld [vmem:[%s252 + $0x10] sm:$0xff]
        %v300 = vld [vmem:[%s252 + $0x18] sm:$0xff]
        %v301 = vld [vmem:[%s252 + $0x20] sm:$0xff]
        %v302 = vld [vmem:[%s252 + $0x28] sm:$0xff]
        %v303 = vld [vmem:[%s252 + $0x30] sm:$0xff]
        %v304 = vld [vmem:[%s252 + $0x38] sm:$0xff]
        %v305 = vld [vmem:[#allocation5] sm:$0x1]
        %v306 = vld [vmem:[#allocation7] sm:$0x1]
        %vm307 = vcmask 523264
        %v308 = vsel %vm307, %v297, 0.0
        %309 = vadd.xlane.f32.xlu0 %v308
        %v310 = vpop.xlane.xlu0 %309
        %v311 = vsel %vm307, %v298, 0.0
        %312 = vadd.xlane.f32.xlu0 %v311
        %v313 = vpop.xlane.xlu0 %312
        %v314 = vsel %vm307, %v299, 0.0
        %315 = vadd.xlane.f32.xlu0 %v314
        %v316 = vpop.xlane.xlu0 %315
        %v317 = vsel %vm307, %v300, 0.0
        %318 = vadd.xlane.f32.xlu0 %v317
        %v319 = vpop.xlane.xlu0 %318
        %v320 = vsel %vm307, %v301, 0.0
        %321 = vadd.xlane.f32.xlu0 %v320
        %v322 = vpop.xlane.xlu0 %321
        %v323 = vsel %vm307, %v302, 0.0
        %324 = vadd.xlane.f32.xlu0 %v323
        %v325 = vpop.xlane.xlu0 %324
        %v326 = vsel %vm307, %v303, 0.0
        %327 = vadd.xlane.f32.xlu0 %v326
        %v328 = vpop.xlane.xlu0 %327
        %v329 = vsel %vm307, %v304, 0.0
        %330 = vadd.xlane.f32.xlu0 %v329
        %v331 = vpop.xlane.xlu0 %330
        %v332 = vrcp.pop 64.0
        %v333 = vmul.f32 %v310, %v332
        %v334 = vmul.f32 %v313, %v332
        %v335 = vmul.f32 %v316, %v332
        %v336 = vmul.f32 %v319, %v332
        %v337 = vmul.f32 %v322, %v332
        %v338 = vmul.f32 %v325, %v332
        %v339 = vmul.f32 %v328, %v332
        %v340 = vmul.f32 %v331, %v332
        %v341 = vsub.f32 %v297, %v333
        %v342 = vsub.f32 %v298, %v334
        %v343 = vsub.f32 %v299, %v335
        %v344 = vsub.f32 %v300, %v336
        %v345 = vsub.f32 %v301, %v337
        %v346 = vsub.f32 %v302, %v338
        %v347 = vsub.f32 %v303, %v339
        %v348 = vsub.f32 %v304, %v340
        %v349 = vmul.f32 %v341, %v341
        %v350 = vmul.f32 %v342, %v342
        %v351 = vmul.f32 %v343, %v343
        %v352 = vmul.f32 %v344, %v344
        %v353 = vmul.f32 %v345, %v345
        %v354 = vmul.f32 %v346, %v346
        %v355 = vmul.f32 %v347, %v347
        %v356 = vmul.f32 %v348, %v348
        %v357 = vsel %vm307, %v349, 0.0
        %358 = vadd.xlane.f32.xlu0 %v357
        %v359 = vpop.xlane.xlu0 %358
        %v360 = vsel %vm307, %v350, 0.0
        %361 = vadd.xlane.f32.xlu0 %v360
        %v362 = vpop.xlane.xlu0 %361
        %v363 = vsel %vm307, %v351, 0.0
        %364 = vadd.xlane.f32.xlu0 %v363
        %v365 = vpop.xlane.xlu0 %364
        %v366 = vsel %vm307, %v352, 0.0
        %367 = vadd.xlane.f32.xlu0 %v366
        %v368 = vpop.xlane.xlu0 %367
        %v369 = vsel %vm307, %v353, 0.0
        %370 = vadd.xlane.f32.xlu0 %v369
        %v371 = vpop.xlane.xlu0 %370
        %v372 = vsel %vm307, %v354, 0.0
        %373 = vadd.xlane.f32.xlu0 %v372
        %v374 = vpop.xlane.xlu0 %373
        %v375 = vsel %vm307, %v355, 0.0
        %376 = vadd.xlane.f32.xlu0 %v375
        %v377 = vpop.xlane.xlu0 %376
        %v378 = vsel %vm307, %v356, 0.0
        %379 = vadd.xlane.f32.xlu0 %v378
        %v380 = vpop.xlane.xlu0 %379
        %v381 = vmul.f32 %v359, %v332
        %v382 = vmul.f32 %v362, %v332
        %v383 = vmul.f32 %v365, %v332
        %v384 = vmul.f32 %v368, %v332
        %v385 = vmul.f32 %v371, %v332
        %v386 = vmul.f32 %v374, %v332
        %v387 = vmul.f32 %v377, %v332
        %v388 = vmul.f32 %v380, %v332
        %v389 = vadd.f32 %v381, 1e-06
        %v390 = vadd.f32 %v382, 1e-06
        %v391 = vadd.f32 %v383, 1e-06
        %v392 = vadd.f32 %v384, 1e-06
        %v393 = vadd.f32 %v385, 1e-06
        %v394 = vadd.f32 %v386, 1e-06
        %v395 = vadd.f32 %v387, 1e-06
        %v396 = vadd.f32 %v388, 1e-06
        %v397 = vrsqrt.pop %v389
        %v398 = vrsqrt.pop %v390
        %v399 = vrsqrt.pop %v391
        %v400 = vrsqrt.pop %v392
        %v401 = vrsqrt.pop %v393
        %v402 = vrsqrt.pop %v394
        %v403 = vrsqrt.pop %v395
        %v404 = vrsqrt.pop %v396
        %v405 = vmul.f32 %v341, %v397
        %v406 = vmul.f32 %v342, %v398
        %v407 = vmul.f32 %v343, %v399
        %v408 = vmul.f32 %v344, %v400
        %v409 = vmul.f32 %v345, %v401
        %v410 = vmul.f32 %v346, %v402
        %v411 = vmul.f32 %v347, %v403
        %v412 = vmul.f32 %v348, %v404
        %v414 = vlaneseq
        %v415 = vshrl.u32 %v414, 7
        %v416 = vsub.s32 0, %v415
        %v417 = vrot.slane %v305, %v416
        %v419 = vmul.f32 %v405, %v417
        %v420 = vmul.f32 %v406, %v417
        %v421 = vmul.f32 %v407, %v417
        %v422 = vmul.f32 %v408, %v417
        %v423 = vmul.f32 %v409, %v417
        %v424 = vmul.f32 %v410, %v417
        %v425 = vmul.f32 %v411, %v417
        %v426 = vmul.f32 %v412, %v417
        %v428 = vlaneseq
        %v429 = vshrl.u32 %v428, 7
        %v430 = vsub.s32 0, %v429
        %v431 = vrot.slane %v306, %v430
        %v433 = vadd.f32 %v419, %v431
        %v434 = vadd.f32 %v420, %v431
        %v435 = vadd.f32 %v421, %v431
        %v436 = vadd.f32 %v422, %v431
        %v437 = vadd.f32 %v423, %v431
        %v438 = vadd.f32 %v424, %v431
        %v439 = vadd.f32 %v425, %v431
        %v440 = vadd.f32 %v426, %v431
        %v441 = vld [vmem:[#allocation8] sm:$0xff]
        %v442 = vld [vmem:[#allocation8 + $0x8] sm:$0xff]
        %v443 = vld [vmem:[#allocation8 + $0x10] sm:$0xff]
        %v444 = vld [vmem:[#allocation8 + $0x18] sm:$0xff]
        %v445 = vld [vmem:[#allocation8 + $0x20] sm:$0xff]
        %v446 = vld [vmem:[#allocation8 + $0x28] sm:$0xff]
        %v447 = vld [vmem:[#allocation8 + $0x30] sm:$0xff]
        %v448 = vld [vmem:[#allocation8 + $0x38] sm:$0xff]
        %v449 = vld [vmem:[#allocation8 + $0x40] sm:$0xff]
        %v450 = vld [vmem:[#allocation8 + $0x48] sm:$0xff]
        %v451 = vld [vmem:[#allocation8 + $0x50] sm:$0xff]
        %v452 = vld [vmem:[#allocation8 + $0x58] sm:$0xff]
        %v453 = vld [vmem:[#allocation8 + $0x60] sm:$0xff]
        %v454 = vld [vmem:[#allocation8 + $0x68] sm:$0xff]
        %v455 = vld [vmem:[#allocation8 + $0x70] sm:$0xff]
        %v456 = vld [vmem:[#allocation8 + $0x78] sm:$0xff]
        %v457 = vld [vmem:[#allocation10] sm:$0x3]
        %v459 = vlaneseq
        %v460 = vshrl.u32 %v459, 7
        %v461 = vsub.s32 0, %v460
        %v462 = vrot.slane %v457, %v461
        %v463 = vlaneseq
        %v464 = vshrl.u32 %v463, 7
        %v465 = vsub.s32 1, %v464
        %v466 = vrot.slane %v457, %v465
        %v470 = vsel %vm307, %v433, 0
        %v473 = vsel %vm307, %v434, 0
        %v476 = vsel %vm307, %v435, 0
        %v479 = vsel %vm307, %v436, 0
        %v482 = vsel %vm307, %v437, 0
        %v485 = vsel %vm307, %v438, 0
        %v488 = vsel %vm307, %v439, 0
        %v491 = vsel %vm307, %v440, 0
        %493 = vmatprep.subr.mxu0 %v442
        %494 = vmatpush1.msra.mxu0 %v441
        %495 = vmatprep.subr.mxu0 %v444
        %496 = vmatpush1.msra.mxu0 %v443
        %497 = vmatprep.subr.mxu0 %v446
        %498 = vmatpush1.msra.mxu0 %v445
        %499 = vmatprep.subr.mxu0 %v448
        %500 = vmatpush1.msra.mxu0 %v447
        %501 = vmatprep.subr.mxu0 %v450
        %502 = vmatpush1.msra.mxu0 %v449
        %503 = vmatprep.subr.mxu0 %v452
        %504 = vmatpush1.msra.mxu0 %v451
        %505 = vmatprep.subr.mxu0 %v454
        %506 = vmatpush1.msra.mxu0 %v453
        %507 = vmatprep.subr.mxu0 %v456
        %508 = vmatpush1.msra.mxu0 %v455
        %509 = vmatprep.subr.mxu0 0.0
        %510 = vmatpush1.msra.mxu0 0.0
        %511 = vmatprep.subr.mxu0 0.0
        %512 = vmatpush1.msra.mxu0 0.0
        %513 = vmatprep.subr.mxu0 0.0
        %514 = vmatpush1.msra.mxu0 0.0
        %515 = vmatprep.subr.mxu0 0.0
        %516 = vmatpush1.msra.mxu0 0.0
        %517 = vmatprep.subr.mxu0 0.0
        %518 = vmatpush1.msra.mxu0 0.0
        %519 = vmatprep.subr.mxu0 0.0
        %520 = vmatpush1.msra.mxu0 0.0
        %521 = vmatprep.subr.mxu0 0.0
        %522 = vmatpush1.msra.mxu0 0.0
        %523 = vmatprep.subr.mxu0 0.0
        %524 = vmatpush1.msra.mxu0 0.0
        %525 = vmatprep.subr.mxu0 0.0
        %526 = vmatpush1.msra.mxu0 0.0
        %527 = vmatprep.subr.mxu0 0.0
        %528 = vmatpush1.msra.mxu0 0.0
        %529 = vmatprep.subr.mxu0 0.0
        %530 = vmatpush1.msra.mxu0 0.0
        %531 = vmatprep.subr.mxu0 0.0
        %532 = vmatpush1.msra.mxu0 0.0
        %533 = vmatprep.subr.mxu0 0.0
        %534 = vmatpush1.msra.mxu0 0.0
        %535 = vmatprep.subr.mxu0 0.0
        %536 = vmatpush1.msra.mxu0 0.0
        %537 = vmatprep.subr.mxu0 0.0
        %538 = vmatpush1.msra.mxu0 0.0
        %539 = vmatprep.subr.mxu0 0.0
        %540 = vmatpush1.msra.mxu0 0.0
        %541 = vmatprep.subr.mxu0 0.0
        %542 = vmatpush1.msra.mxu0 0.0
        %543 = vmatprep.subr.mxu0 0.0
        %544 = vmatpush1.msra.mxu0 0.0
        %545 = vmatprep.subr.mxu0 0.0
        %546 = vmatpush1.msra.mxu0 0.0
        %547 = vmatprep.subr.mxu0 0.0
        %548 = vmatpush1.msra.mxu0 0.0
        %549 = vmatprep.subr.mxu0 0.0
        %550 = vmatpush1.msra.mxu0 0.0
        %551 = vmatprep.subr.mxu0 0.0
        %552 = vmatpush1.msra.mxu0 0.0
        %553 = vmatprep.subr.mxu0 0.0
        %554 = vmatpush1.msra.mxu0 0.0
        %555 = vmatprep.subr.mxu0 0.0
        %556 = vmatpush1.msra.mxu0 0.0
        %557 = vmatprep.mubr.f32.mxu0 0.0
        %558 = vmatmul.mubr.f32.gmra.mrb[0].mxu0 %v470
        %v559 = vpop.f32.mrb[0].mxu0
        %v560 = vadd.f32 %v462, %v559
        %v561 = vpop.f32.mrb[0].mxu0
        %v562 = vadd.f32 %v466, %v561
        %563 = vmatprep.mubr.f32.mxu0 0.0
        %564 = vmatmul.mubr.f32.gmra.mrb[0].mxu0 %v473
        %v565 = vpop.f32.mrb[0].mxu0
        %v566 = vadd.f32 %v462, %v565
        %v567 = vpop.f32.mrb[0].mxu0
        %v568 = vadd.f32 %v466, %v567
        %569 = vmatprep.mubr.f32.mxu0 0.0
        %570 = vmatmul.mubr.f32.gmra.mrb[0].mxu0 %v476
        %v571 = vpop.f32.mrb[0].mxu0
        %v572 = vadd.f32 %v462, %v571
        %v573 = vpop.f32.mrb[0].mxu0
        %v574 = vadd.f32 %v466, %v573
        %575 = vmatprep.mubr.f32.mxu0 0.0
        %576 = vmatmul.mubr.f32.gmra.mrb[0].mxu0 %v479
        %v577 = vpop.f32.mrb[0].mxu0
        %v578 = vadd.f32 %v462, %v577
        %v579 = vpop.f32.mrb[0].mxu0
        %v580 = vadd.f32 %v466, %v579
        %581 = vmatprep.mubr.f32.mxu0 0.0
        %582 = vmatmul.mubr.f32.gmra.mrb[0].mxu0 %v482
        %v583 = vpop.f32.mrb[0].mxu0
        %v584 = vadd.f32 %v462, %v583
        %v585 = vpop.f32.mrb[0].mxu0
        %v586 = vadd.f32 %v466, %v585
        %587 = vmatprep.mubr.f32.mxu0 0.0
        %588 = vmatmul.mubr.f32.gmra.mrb[0].mxu0 %v485
        %v589 = vpop.f32.mrb[0].mxu0
        %v590 = vadd.f32 %v462, %v589
        %v591 = vpop.f32.mrb[0].mxu0
        %v592 = vadd.f32 %v466, %v591
        %593 = vmatprep.mubr.f32.mxu0 0.0
        %594 = vmatmul.mubr.f32.gmra.mrb[0].mxu0 %v488
        %v595 = vpop.f32.mrb[0].mxu0
        %v596 = vadd.f32 %v462, %v595
        %v597 = vpop.f32.mrb[0].mxu0
        %v598 = vadd.f32 %v466, %v597
        %599 = vmatprep.mubr.f32.mxu0 0.0
        %600 = vmatmul.mubr.f32.gmra.mrb[0].mxu0 %v491
        %v601 = vpop.f32.mrb[0].mxu0
        %v602 = vadd.f32 %v462, %v601
        %v603 = vpop.f32.mrb[0].mxu0
        %v604 = vadd.f32 %v466, %v603
        %605 = vdwg.mxu0
        %606 = vst [vmem:[%s294] sm:$0xff] %v560
        %607 = vst.msk [vmem:[%s294 + $0x8] sm:$0xff] %vm307, %v562
        %608 = vst [vmem:[%s294 + $0x10] sm:$0xff] %v566
        %609 = vst.msk [vmem:[%s294 + $0x18] sm:$0xff] %vm307, %v568
        %610 = vst [vmem:[%s294 + $0x20] sm:$0xff] %v572
        %611 = vst.msk [vmem:[%s294 + $0x28] sm:$0xff] %vm307, %v574
        %612 = vst [vmem:[%s294 + $0x30] sm:$0xff] %v578
        %613 = vst.msk [vmem:[%s294 + $0x38] sm:$0xff] %vm307, %v580
        %614 = vst [vmem:[%s294 + $0x40] sm:$0xff] %v584
        %615 = vst.msk [vmem:[%s294 + $0x48] sm:$0xff] %vm307, %v586
        %616 = vst [vmem:[%s294 + $0x50] sm:$0xff] %v590
        %617 = vst.msk [vmem:[%s294 + $0x58] sm:$0xff] %vm307, %v592
        %618 = vst [vmem:[%s294 + $0x60] sm:$0xff] %v596
        %619 = vst.msk [vmem:[%s294 + $0x68] sm:$0xff] %vm307, %v598
        %620 = vst [vmem:[%s294 + $0x70] sm:$0xff] %v602
        %621 = vst.msk [vmem:[%s294 + $0x78] sm:$0xff] %vm307, %v604
        %s622 = sand.u32 %s142, 1
        %s623 = scalar_lea.sflag [#allocation4], %s622
        %s624 = sand.u32 %s142, 1
        %s625 = smul.addr %s624, 128
        %s626 = scalar_lea.vmem [#allocation11], %s625
        // Predicated region
        $region61: #{tpu_custom_call.1} parent=39 // pred_check
          %p627 = pneg %p152
        $region62: #{tpu_custom_call.1} parent=39 // pred_check_branch
          %629 = sbr.rel (%p627) target = $region64
        $region63: #{tpu_custom_call.1} parent=39 // pred_region
          %s630 = smul.u32 8, %s24
          %s632 = ssub.s32 2048, 2048
          %633 = vsyncadd %s623, %s632
          %s634 = smul.addr %s630, 2
          %s635 = smul.addr %s634, 128
          %s636 = scalar_lea.hbm %s5, %s635
          %s637 = sshll.u32 %s626, 4
          %s638 = int_to_ptr.vmem [resolvable:$true] %s637
          %643 = dma.vmem_to_hbm [thread:$0]  %s638, 2048, %s636, %s623, 256, 256, 16
        $region64: #{tpu_custom_call.1} parent=39 // pred_fallthru
          _
      $region40: #{tpu_custom_call.1} parent=5 // pred_fallthru
        _
      %p644 = scmp.le.s32.totalorder 2, %s19
      // Predicated region
      $region65: #{tpu_custom_call.1} parent=5 // pred_check
        %p645 = pneg %p644
      $region66: #{tpu_custom_call.1} parent=5 // pred_check_branch
        %647 = sbr.rel (%p645) target = $region68
      $region67: #{tpu_custom_call.1} parent=5 // pred_region
        %s648 = ssub.s32 %s19, 2
        // Predicated region
        $region69: #{tpu_custom_call.1} parent=67 // pred_check
          %p649 = pneg %p158
        $region70: #{tpu_custom_call.1} parent=67 // pred_check_branch
          %651 = sbr.rel (%p649) target = $region72
        $region71: #{tpu_custom_call.1} parent=67 // pred_region
          %s652 = sand.u32 %s143, 1
          %s653 = scalar_lea.sflag [#allocation4], %s652
          %s654 = sand.u32 %s143, 1
          %s655 = smul.addr %s654, 128
          %s656 = scalar_lea.vmem [#allocation11], %s655
          %657 = dma.done %s653, 2048
        $region72: #{tpu_custom_call.1} parent=67 // pred_fallthru
          _
      $region68: #{tpu_custom_call.1} parent=5 // pred_fallthru
        _
    $region6: #{tpu_custom_call.1} parent=1 // loop_footer
      %s23 = sadd.s32 1, %s19
    $region7: #{tpu_custom_call.1} parent=1 // loop_footer_branch
      %18 = sbr.rel target = $region3
    $region8: #{tpu_custom_call.1} parent=1 // loop_exit
      _
    %658 = vsyncpa [#allocation3], 1
    %s659 = scalar_lea.sflag [#allocation3], 1
    %660 = vsyncpa %s659, 1
    %661 = vsyncpa [#allocation6], 1
    %662 = vsyncpa [#allocation9], 1
    %663 = vsyncpa [#allocation4], 1
    %s664 = scalar_lea.sflag [#allocation4], 1
    %665 = vsyncpa %s664, 1

</llo_original>
